<compile_context>
chip_gen: v6e
topology: v6e:2x2x1
jax: 0.10.0
libtpu: 0.0.40
codegen_flags: <defaults>
</compile_context>

<pallas_src>
import functools

import jax
import jax.numpy as jnp
from jax.experimental import pallas as pl
from jax.experimental.pallas import tpu as pltpu

DICE_WEIGHT = 0.5
CHAMFER_WEIGHT = 0.5
SMOOTH = 1e-6

LANES = 128
TILE_ROWS = 2048      # (2048,128) f32 block = 1 MiB per input
MAX_PTS = 256         # fixed boundary-point budget per point set
N_CORES = 2           # leading 'parallel' axis (2 TCs on v7x; no-op elsewhere)


# ----------------------------------------------------------------------------
# Dice loss kernel: lane-wise partial sums of sigmoid(pred)*target,
# sigmoid(pred), target.  Output: per-core (1, 3, 128) partial-sum block.
# ----------------------------------------------------------------------------
def _dice_kernel(pred_ref, tgt_ref, out_ref, *, tile_r, total):
    c = pl.program_id(0)          # core-parallel axis
    i = pl.program_id(1)          # reduction axis (arbitrary)
    n_i = pl.num_programs(1)

    @pl.when(i == 0)
    def _():
        out_ref[...] = jnp.zeros_like(out_ref)

    # Global element index of each (row, lane) slot of this block; anything
    # >= total (tail pad, partial/out-of-range blocks) is masked to zero.
    base = (c * n_i + i) * (tile_r * LANES)
    r_iota = jax.lax.broadcasted_iota(jnp.int32, (tile_r, LANES), 0)
    l_iota = jax.lax.broadcasted_iota(jnp.int32, (tile_r, LANES), 1)
    valid = (base + r_iota * LANES + l_iota) < total

    p = jnp.where(valid, jax.nn.sigmoid(pred_ref[...].astype(jnp.float32)), 0.0)
    t = jnp.where(valid, tgt_ref[...].astype(jnp.float32), 0.0)

    inter = jnp.sum(p * t, axis=0, keepdims=True)   # (1, 128)
    psum = jnp.sum(p, axis=0, keepdims=True)        # (1, 128)
    tsum = jnp.sum(t, axis=0, keepdims=True)        # (1, 128)
    out_ref[0] += jnp.concatenate([inter, psum, tsum], axis=0)   # (3, 128)


def dice_loss_pallas(pred, target, smooth=SMOOTH):
    total = pred.size
    chunk = 8 * LANES                                  # minimal row alignment
    padded = ((total + chunk - 1) // chunk) * chunk
    p_flat = pred.reshape(-1)                          # free reshape, keep dtype
    t_flat = target.reshape(-1)
    if padded != total:                                # tiny tail pad only
        p_flat = jnp.pad(p_flat, (0, padded - total))
        t_flat = jnp.pad(t_flat, (0, padded - total))
    rows = padded // LANES
    p2 = p_flat.reshape(rows, LANES)
    t2 = t_flat.reshape(rows, LANES)

    tile_r = min(TILE_ROWS, rows)                      # multiple of 8, <= rows
    steps_total = (rows + tile_r - 1) // tile_r
    steps_per_core = (steps_total + N_CORES - 1) // N_CORES

    def in_map(c, i):
        # Clamp so the DMA never targets a fully out-of-range block; the
        # in-kernel validity mask zeroes those contributions anyway.
        blk = jnp.minimum(c * steps_per_core + i, steps_total - 1)
        return (blk, 0)

    partials = pl.pallas_call(
        functools.partial(_dice_kernel, tile_r=tile_r, total=total),
        out_shape=jax.ShapeDtypeStruct((N_CORES, 3, LANES), jnp.float32),
        grid_spec=pltpu.PrefetchScalarGridSpec(
            num_scalar_prefetch=0,
            grid=(N_CORES, steps_per_core),
            in_specs=[pl.BlockSpec((tile_r, LANES), in_map),
                      pl.BlockSpec((tile_r, LANES), in_map)],
            out_specs=pl.BlockSpec((1, 3, LANES), lambda c, i: (c, 0, 0))),
        compiler_params=pltpu.CompilerParams(
            dimension_semantics=("parallel", "arbitrary")),
    )(p2, t2)

    sums = jnp.sum(partials, axis=(0, 2))              # (3,)
    inter, psum, tsum = sums[0], sums[1], sums[2]
    dice = (2.0 * inter + smooth) / (psum + tsum + smooth)
    return 1.0 - dice


# ----------------------------------------------------------------------------
# Chamfer distance kernel between two padded point sets.
#   ay, ax: (P, 1)   y / x coordinates of set A
#   by, bx: (1, P)   y / x coordinates of set B
#   counts: (2,) int32 number of valid points in A, B (scalar-prefetched).
# Symmetric chamfer: mean_i min_j ||a_i-b_j||^2 + mean_j min_i ||a_i-b_j||^2
# ----------------------------------------------------------------------------
def _chamfer_kernel(counts_ref, ay_ref, ax_ref, by_ref, bx_ref, out_ref):
    n_a = counts_ref[0]
    n_b = counts_ref[1]

    dy = ay_ref[...] - by_ref[...]                     # (P, P) via broadcast
    dx = ax_ref[...] - bx_ref[...]
    d = dy * dy + dx * dx                              # exact, VPU only

    P = MAX_PTS
    big = jnp.float32(1e30)
    row_i = jax.lax.broadcasted_iota(jnp.int32, (P, P), 0)
    col_j = jax.lax.broadcasted_iota(jnp.int32, (P, P), 1)
    valid_a = jax.lax.broadcasted_iota(jnp.int32, (P, 1), 0) < n_a
    valid_b = jax.lax.broadcasted_iota(jnp.int32, (1, P), 1) < n_b

    # a -> b direction
    min_ab = jnp.min(jnp.where(col_j < n_b, d, big), axis=1, keepdims=True)
    sum_ab = jnp.sum(jnp.where(valid_a, min_ab, 0.0))
    # b -> a direction
    min_ba = jnp.min(jnp.where(row_i < n_a, d, big), axis=0, keepdims=True)
    sum_ba = jnp.sum(jnp.where(valid_b, min_ba, 0.0))

    both = jnp.logical_and(n_a > 0, n_b > 0)           # gate BOTH directions
    na_f = jnp.maximum(n_a, 1).astype(jnp.float32)
    nb_f = jnp.maximum(n_b, 1).astype(jnp.float32)
    mean_ab = jnp.where(both, sum_ab / na_f, 0.0)
    mean_ba = jnp.where(both, sum_ba / nb_f, 0.0)
    out_ref[0] = mean_ab + mean_ba


def _extract_boundary_points(mask, max_pts):
    """Approximate boundary extraction (plain JAX glue).

    The reference calls `mask.contour()`, which does not exist on torch
    Tensors; we approximate the polygon boundary as mask pixels whose
    4-neighborhood is not fully inside the mask.
    """
    # TODO(synk): Tensor.contour() is undefined in the reference; morphological
    # edge (mask & ~erode(mask)) is used as a stand-in boundary extractor.
    m = mask[:, 0]                                     # (B, H, W) bool
    B, H, W = m.shape
    n = B * H * W
    zrow = jnp.zeros((B, 1, W), bool)
    zcol = jnp.zeros((B, H, 1), bool)
    up = jnp.concatenate([zrow, m[:, :-1, :]], axis=1)
    down = jnp.concatenate([m[:, 1:, :], zrow], axis=1)
    left = jnp.concatenate([zcol, m[:, :, :-1]], axis=2)
    right = jnp.concatenate([m[:, :, 1:], zcol], axis=2)
    interior = m & up & down & left & right
    boundary = (m & ~interior).reshape(-1)             # (B*H*W,)

    count = jnp.minimum(jnp.sum(boundary.astype(jnp.int32)), max_pts)
    # O(N) top_k selection of boundary pixels (replaces the argsort compaction).
    k = min(max_pts, n)
    _, idx = jax.lax.top_k(boundary.astype(jnp.int32), k)
    if k < max_pts:
        idx = jnp.pad(idx, (0, max_pts - k))
    y = ((idx % (H * W)) // W).astype(jnp.float32)
    x = (idx % W).astype(jnp.float32)
    return y, x, count


def chamfer_loss_pallas(pred, target):
    pred_mask = pred > 0                               # == sigmoid(pred) > 0.5
    tgt_mask = target > 0.5
    ay, ax, n_a = _extract_boundary_points(pred_mask, MAX_PTS)
    by, bx, n_b = _extract_boundary_points(tgt_mask, MAX_PTS)

    counts = jnp.stack([n_a, n_b]).astype(jnp.int32)
    AY = ay.reshape(MAX_PTS, 1)
    AX = ax.reshape(MAX_PTS, 1)
    BY = by.reshape(1, MAX_PTS)
    BX = bx.reshape(1, MAX_PTS)

    out = pl.pallas_call(
        _chamfer_kernel,
        out_shape=jax.ShapeDtypeStruct((1,), jnp.float32),
        grid_spec=pltpu.PrefetchScalarGridSpec(
            num_scalar_prefetch=1,
            grid=(1,),
            in_specs=[
                pl.BlockSpec((MAX_PTS, 1), lambda i, counts: (0, 0)),
                pl.BlockSpec((MAX_PTS, 1), lambda i, counts: (0, 0)),
                pl.BlockSpec((1, MAX_PTS), lambda i, counts: (0, 0)),
                pl.BlockSpec((1, MAX_PTS), lambda i, counts: (0, 0)),
            ],
            out_specs=pl.BlockSpec(memory_space=pltpu.MemorySpace.SMEM)),
        compiler_params=pltpu.CompilerParams(
            dimension_semantics=("arbitrary",)),
    )(counts, AY, AX, BY, BX)
    return out[0]


def polygon_canopy_loss(predictions, target,
                        dice_weight=DICE_WEIGHT, chamfer_weight=CHAMFER_WEIGHT):
    # TODO(synk): `ChamferDistance` is never defined/imported in the reference
    # module; a standard symmetric (squared-NN, per-direction mean) chamfer is
    # used here.
    d = dice_loss_pallas(predictions, target)
    c = chamfer_loss_pallas(predictions, target)
    return dice_weight * d + chamfer_weight * c


if __name__ == "__main__":
    key = jax.random.PRNGKey(0)
    B, C, H, W = 2, 1, 16, 16
    preds = jax.random.normal(key, (B, C, H, W), jnp.float32)

    # Deterministic rectangular ground-truth polygon masks.
    yy = jnp.arange(H)[:, None]
    xx = jnp.arange(W)[None, :]
    rect0 = ((yy >= 3) & (yy < 11) & (xx >= 4) & (xx < 12)).astype(jnp.float32)
    rect1 = ((yy >= 5) & (yy < 13) & (xx >= 2) & (xx < 10)).astype(jnp.float32)
    target = jnp.stack([rect0, rect1])[:, None]        # (2, 1, 16, 16)

    loss = polygon_canopy_loss(preds, target)
    loss = jax.block_until_ready(loss)
    assert jnp.isfinite(loss), "loss is not finite"
    print("KERNEL_OK")
</pallas_src>

<mosaic_0001>
module attributes {stable_mosaic.version = 11 : i64} {
  func.func @_dice_kernel(%arg0: i32, %arg1: i32, %arg2: memref<8x128xf32, #tpu.memory_space<vmem>>, %arg3: memref<8x128xf32, #tpu.memory_space<vmem>>, %arg4: memref<1x3x128xf32, #tpu.memory_space<vmem>>) attributes {dimension_semantics = [#tpu.dimension_semantics<parallel>, #tpu.dimension_semantics<arbitrary>], iteration_bounds = array<i64: 2, 1>, scalar_prefetch = 0 : i64, scratch_operands = 0 : i64, tpu.core_type = #tpu.core_type<tc>, window_params = [{transform_indices = @transform_0, window_bounds = array<i64: 8, 128>}, {transform_indices = @transform_1, window_bounds = array<i64: 8, 128>}, {transform_indices = @transform_2, window_bounds = array<i64: 1, 3, 128>}]} {
    %c0_i32 = arith.constant 0 : i32
    %0 = arith.cmpi eq, %arg1, %c0_i32 : i32
    %1 = arith.extui %0 : i1 to i32
    %c0_i32_0 = arith.constant 0 : i32
    %2 = arith.cmpi ne, %1, %c0_i32_0 : i32
    scf.if %2 {
      %cst_15 = arith.constant 0.000000e+00 : f32
      %40 = vector.broadcast %cst_15 : f32 to vector<1x3x128xf32>
      %c0_16 = arith.constant 0 : index
      %c0_17 = arith.constant 0 : index
      %c0_18 = arith.constant 0 : index
      %41 = vector.load %arg4[%c0_16, %c0_17, %c0_18] : memref<1x3x128xf32, #tpu.memory_space<vmem>>, vector<1x3x128xf32>
      tpu.vector_store %arg4[%c0_16, %c0_17, %c0_18], %40 {strides = array<i32>} : memref<1x3x128xf32, #tpu.memory_space<vmem>>, vector<1x3x128xf32>,
    } else {
    }
    %c1_i32 = arith.constant 1 : i32
    %3 = arith.muli %arg0, %c1_i32 : i32
    %4 = arith.addi %3, %arg1 : i32
    %c1024_i32 = arith.constant 1024 : i32
    %5 = arith.muli %4, %c1024_i32 : i32
    %6 = tpu.iota {dimensions = array<i32: 0>} : vector<8x128xi32>
    %7 = tpu.iota {dimensions = array<i32: 1>} : vector<8x128xi32>
    %c128_i32 = arith.constant 128 : i32
    %8 = vector.broadcast %c128_i32 : i32 to vector<8x128xi32>
    %9 = arith.muli %6, %8 : vector<8x128xi32>
    %10 = vector.broadcast %5 : i32 to vector<8x128xi32>
    %11 = arith.addi %10, %9 : vector<8x128xi32>
    %12 = arith.addi %11, %7 : vector<8x128xi32>
    %c512_i32 = arith.constant 512 : i32
    %13 = vector.broadcast %c512_i32 : i32 to vector<8x128xi32>
    %14 = arith.cmpi slt, %12, %13 : vector<8x128xi32>
    %c0 = arith.constant 0 : index
    %c0_1 = arith.constant 0 : index
    %15 = vector.load %arg2[%c0, %c0_1] : memref<8x128xf32, #tpu.memory_space<vmem>>, vector<8x128xf32>
    %16 = arith.negf %15 : vector<8x128xf32>
    %17 = math.exp %16 : vector<8x128xf32>
    %cst = arith.constant 1.000000e+00 : f32
    %18 = vector.broadcast %cst : f32 to vector<8x128xf32>
    %19 = arith.addf %18, %17 : vector<8x128xf32>
    %20 = arith.divf %18, %19 : vector<8x128xf32>
    %cst_2 = arith.constant 0.000000e+00 : f32
    %21 = vector.broadcast %cst_2 : f32 to vector<8x128xf32>
    %22 = arith.select %14, %20, %21 : vector<8x128xi1>, vector<8x128xf32>
    %c0_3 = arith.constant 0 : index
    %c0_4 = arith.constant 0 : index
    %23 = vector.load %arg3[%c0_3, %c0_4] : memref<8x128xf32, #tpu.memory_space<vmem>>, vector<8x128xf32>
    %cst_5 = arith.constant 0.000000e+00 : f32
    %24 = vector.broadcast %cst_5 : f32 to vector<8x128xf32>
    %25 = arith.select %14, %23, %24 : vector<8x128xi1>, vector<8x128xf32>
    %26 = arith.mulf %22, %25 : vector<8x128xf32>
    %cst_6 = arith.constant dense<0.000000e+00> : vector<128xf32>
    %27 = vector.multi_reduction <add>, %26, %cst_6 [0] : vector<8x128xf32> to vector<128xf32>
    %28 = vector.shape_cast %27 : vector<128xf32> to vector<1x128xf32>
    %cst_7 = arith.constant dense<0.000000e+00> : vector<128xf32>
    %29 = vector.multi_reduction <add>, %22, %cst_7 [0] : vector<8x128xf32> to vector<128xf32>
    %30 = vector.shape_cast %29 : vector<128xf32> to vector<1x128xf32>
    %cst_8 = arith.constant dense<0.000000e+00> : vector<128xf32>
    %31 = vector.multi_reduction <add>, %25, %cst_8 [0] : vector<8x128xf32> to vector<128xf32>
    %32 = vector.shape_cast %31 : vector<128xf32> to vector<1x128xf32>
    %c0_9 = arith.constant 0 : index
    %c0_10 = arith.constant 0 : index
    %c0_11 = arith.constant 0 : index
    %33 = vector.load %arg4[%c0_9, %c0_10, %c0_11] : memref<1x3x128xf32, #tpu.memory_space<vmem>>, vector<1x3x128xf32>
    %34 = vector.shape_cast %33 : vector<1x3x128xf32> to vector<3x128xf32>
    %35 = tpu.concatenate %28, %30, %32 in 0 : vector<1x128xf32>, vector<1x128xf32>, vector<1x128xf32> -> vector<3x128xf32>
    %36 = arith.addf %34, %35 : vector<3x128xf32>
    %c0_12 = arith.constant 0 : index
    %c0_13 = arith.constant 0 : index
    %c0_14 = arith.constant 0 : index
    %37 = vector.load %arg4[%c0_12, %c0_13, %c0_14] : memref<1x3x128xf32, #tpu.memory_space<vmem>>, vector<1x3x128xf32>
    %38 = vector.shape_cast %37 : vector<1x3x128xf32> to vector<3x128xf32>
    %39 = vector.shape_cast %36 : vector<3x128xf32> to vector<1x3x128xf32>
    tpu.vector_store %arg4[%c0_12, %c0_13, %c0_14], %39 {strides = array<i32>} : memref<1x3x128xf32, #tpu.memory_space<vmem>>, vector<1x3x128xf32>,
    return
  }
  func.func @transform_0(%arg0: i32, %arg1: i32) -> (i32, i32) {
    %c1_i32 = arith.constant 1 : i32
    %0 = arith.muli %arg0, %c1_i32 : i32
    %1 = arith.addi %0, %arg1 : i32
    %c0_i32 = arith.constant 0 : i32
    %2 = arith.minsi %1, %c0_i32 : i32
    %c0_i32_0 = arith.constant 0 : i32
    %c0_i32_1 = arith.constant 0 : i32
    return %2, %c0_i32_0 : i32, i32
  }
  func.func @transform_1(%arg0: i32, %arg1: i32) -> (i32, i32) {
    %c1_i32 = arith.constant 1 : i32
    %0 = arith.muli %arg0, %c1_i32 : i32
    %1 = arith.addi %0, %arg1 : i32
    %c0_i32 = arith.constant 0 : i32
    %2 = arith.minsi %1, %c0_i32 : i32
    %c0_i32_0 = arith.constant 0 : i32
    %c0_i32_1 = arith.constant 0 : i32
    return %2, %c0_i32_0 : i32, i32
  }
  func.func @transform_2(%arg0: i32, %arg1: i32) -> (i32, i32, i32) {
    %c0_i32 = arith.constant 0 : i32
    %c0_i32_0 = arith.constant 0 : i32
    %c0_i32_1 = arith.constant 0 : i32
    return %arg0, %c0_i32, %c0_i32_0 : i32, i32, i32
  }
}

</mosaic_0001>

<llo_original>
// kernel: tpu_custom_call.1
$region0: #{tpu_custom_call.1}
  #allocation0 [shape = 'u32[]', space=smem, size = 0x4, offset = 0x4, fixed_abs, tag = 'smem constant byte address 0x4 - core index']
  #allocation1 [shape = 'u32[144,128]{1,0:T(1,128)}', space=vmem, size = 0x12000, scoped, tag = 'internal scratch']
  %s0 = inlined_call_operand.hbm [shape: f32[8,128], index: 0, kind: input, shape index: {}]
  %s1 = inlined_call_operand.hbm [shape: f32[8,128], index: 1, kind: input, shape index: {}]
  %s2 = inlined_call_operand.vmem [shape: f32[2,3,128], index: 2, kind: output, shape index: {}]
  %s3 = sld [smem:[#allocation0]]
  $region53: #{tpu_custom_call.1} parent=0
    _
  %s5 = ssub.s32 1, %s3
  %s6 = scalar_select 0, %s5, %s3
  $region1: #{tpu_custom_call.1} parent=0
    #allocation2 [shape = 'u8[8192]{0}', space=vmem, size = 0x2000, scoped, tag = 'input window, operand 0']
    #allocation3 [shape = 's32[2]{0}', space=sflag, size = 0x8, scoped, tag = 'scoped memory for tpu_custom_call.1']
    #allocation4 [shape = 'u8[8192]{0}', space=vmem, size = 0x2000, scoped, tag = 'input window, operand 1']
    #allocation5 [shape = 's32[2]{0}', space=sflag, size = 0x8, scoped, tag = 'scoped memory for tpu_custom_call.1']
    %7 = vsyncpa [#allocation3], 0
    %s8 = scalar_lea.sflag [#allocation3], 1
    %9 = vsyncpa %s8, 0
    %10 = vsyncpa [#allocation5], 0
    %s11 = scalar_lea.sflag [#allocation5], 1
    %12 = vsyncpa %s11, 0
    loop: start=0, step=1, limit=4
    $region2: #{tpu_custom_call.1} parent=1 // loop_pre_header
      _
    $region3: #{tpu_custom_call.1} parent=1 // loop_header
      %s14 = sphi 0, %s18
      %p15 = scmp.ge.s32.totalorder %s14, 4
      %s21 = sphi 0, %s33
      %s22 = sphi 0, %s29
      %s23 = sphi 0, %s21
      %s24 = sphi 0, %s22
      %s25 = sphi 0, %s23
      %s26 = sphi 0, %s24
      %s42 = sphi 0, %s44
      %s45 = sphi 0, %s42
      %s46 = sphi 0, %s45
      %s62 = sphi 0, %s46
      %s74 = sphi 0, %s76
      %s77 = sphi 0, %s74
      %s78 = sphi 0, %s77
      %s94 = sphi 0, %s78
      %s100 = sphi 0, %s102
      %s103 = sphi 0, %s100
      %s104 = sphi 0, %s103
      %s120 = sphi 0, %s104
    $region4: #{tpu_custom_call.1} parent=1 // loop_header_branch
      %17 = sbr.rel (%p15) target = $region8
    $region5: #{tpu_custom_call.1} parent=1 // loop_body
      %s19 = ssub.s32 %s14, 1
      %s20 = ssub.s32 %s14, 2
      %s27 = sadd.s32 1, %s22
      %p28 = scmp.ge.s32.totalorder %s27, 1
      %s29 = scalar_select %p28, 0, %s27
      %s30 = sadd.s32 1, %s21
      %s31 = scalar_select %p28, %s30, %s21
      %p32 = scmp.ge.s32.totalorder %s31, 2
      %s33 = scalar_select %p32, 0, %s31
      %s34 = sadd.s32 %s21, %s22
      %p35 = scmp.lt.s32.totalorder %s34, 0
      %s36 = scalar_select %p35, %s34, 0
      %s37 = sadd.s32 %s33, %s29
      %p38 = scmp.lt.s32.totalorder %s37, 0
      %s39 = scalar_select %p38, %s37, 0
      %s40 = ssub.s32 %s36, %s39
      %p41 = scmp.eq.s32.totalorder %s40, 0
      %s43 = sadd.s32 %s42, 1
      %s44 = scalar_select %p41, %s42, %s43
      %p47 = pneg %p41
      %p48 = scmp.eq.s32.totalorder %s14, 1
      %p49 = por %p47, %p48
      %p50 = scmp.ne.s32.totalorder %s42, %s45
      %p51 = scmp.eq.s32.totalorder %s14, 0
      %p52 = por %p50, %p51
      %p53 = scmp.ne.s32.totalorder %s42, %s45
      %p54 = scmp.eq.s32.totalorder %s19, 1
      %p55 = por %p53, %p54
      %p56 = scmp.ne.s32.totalorder %s45, %s46
      %p57 = scmp.eq.s32.totalorder %s19, 0
      %p58 = por %p56, %p57
      %p59 = scmp.ne.s32.totalorder %s45, %s46
      %p60 = scmp.eq.s32.totalorder %s20, 1
      %p61 = por %p59, %p60
      %p63 = scmp.ne.s32.totalorder %s46, %s62
      %p64 = scmp.eq.s32.totalorder %s20, 0
      %p65 = por %p63, %p64
      %s66 = sadd.s32 %s21, %s22
      %p67 = scmp.lt.s32.totalorder %s66, 0
      %s68 = scalar_select %p67, %s66, 0
      %s69 = sadd.s32 %s33, %s29
      %p70 = scmp.lt.s32.totalorder %s69, 0
      %s71 = scalar_select %p70, %s69, 0
      %s72 = ssub.s32 %s68, %s71
      %p73 = scmp.eq.s32.totalorder %s72, 0
      %s75 = sadd.s32 %s74, 1
      %s76 = scalar_select %p73, %s74, %s75
      %p79 = pneg %p73
      %p80 = scmp.eq.s32.totalorder %s14, 1
      %p81 = por %p79, %p80
      %p82 = scmp.ne.s32.totalorder %s74, %s77
      %p83 = scmp.eq.s32.totalorder %s14, 0
      %p84 = por %p82, %p83
      %p85 = scmp.ne.s32.totalorder %s74, %s77
      %p86 = scmp.eq.s32.totalorder %s19, 1
      %p87 = por %p85, %p86
      %p88 = scmp.ne.s32.totalorder %s77, %s78
      %p89 = scmp.eq.s32.totalorder %s19, 0
      %p90 = por %p88, %p89
      %p91 = scmp.ne.s32.totalorder %s77, %s78
      %p92 = scmp.eq.s32.totalorder %s20, 1
      %p93 = por %p91, %p92
      %p95 = scmp.ne.s32.totalorder %s78, %s94
      %p96 = scmp.eq.s32.totalorder %s20, 0
      %p97 = por %p95, %p96
      %s98 = ssub.s32 %s21, %s33
      %p99 = scmp.eq.s32.totalorder %s98, 0
      %s101 = sadd.s32 %s100, 1
      %s102 = scalar_select %p99, %s100, %s101
      %p105 = pneg %p99
      %p106 = scmp.eq.s32.totalorder %s14, 1
      %p107 = por %p105, %p106
      %p108 = scmp.ne.s32.totalorder %s100, %s103
      %p109 = scmp.eq.s32.totalorder %s14, 0
      %p110 = por %p108, %p109
      %p111 = scmp.ne.s32.totalorder %s100, %s103
      %p112 = scmp.eq.s32.totalorder %s19, 1
      %p113 = por %p111, %p112
      %p114 = scmp.ne.s32.totalorder %s103, %s104
      %p115 = scmp.eq.s32.totalorder %s19, 0
      %p116 = por %p114, %p115
      %p117 = scmp.ne.s32.totalorder %s103, %s104
      %p118 = scmp.eq.s32.totalorder %s20, 1
      %p119 = por %p117, %p118
      %p121 = scmp.ne.s32.totalorder %s104, %s120
      %p122 = scmp.eq.s32.totalorder %s20, 0
      %p123 = por %p121, %p122
      %p124 = scmp.le.s32.totalorder 1, %s14
      %p125 = scmp.lt.s32.totalorder %s14, 3
      %p126 = pnand %p124, %p125
      %p127 = pneg %p126
      // Predicated region
      $region9: #{tpu_custom_call.1} parent=5 // pred_check
        _
      $region10: #{tpu_custom_call.1} parent=5 // pred_check_branch
        %129 = sbr.rel (%p126) target = $region12
      $region11: #{tpu_custom_call.1} parent=5 // pred_region
        %s130 = ssub.s32 %s14, 1
      $region12: #{tpu_custom_call.1} parent=5 // pred_fallthru
        _
      %p131 = scmp.lt.s32.totalorder %s14, 2
      // Predicated region
      $region13: #{tpu_custom_call.1} parent=5 // pred_check
        %p132 = pneg %p131
      $region14: #{tpu_custom_call.1} parent=5 // pred_check_branch
        %134 = sbr.rel (%p132) target = $region16
      $region15: #{tpu_custom_call.1} parent=5 // pred_region
        // Predicated region
        $region17: #{tpu_custom_call.1} parent=15 // pred_check
          %p135 = pneg %p52
        $region18: #{tpu_custom_call.1} parent=15 // pred_check_branch
          %137 = sbr.rel (%p135) target = $region20
        $region19: #{tpu_custom_call.1} parent=15 // pred_region
          %s138 = sand.u32 %s42, 1
          %s139 = scalar_lea.sflag [#allocation3], %s138
          %s140 = sand.u32 %s42, 1
          %s141 = smul.addr %s140, 8
          %s142 = scalar_lea.vmem [#allocation2], %s141
          %s143 = sadd.s32 %s21, %s22
          %p144 = scmp.lt.s32.totalorder %s143, 0
          %s145 = scalar_select %p144, %s143, 0
          %s147 = ssub.s32 128, 128
          %148 = vsyncadd %s139, %s147
          %s149 = smul.addr %s145, 128
          %s150 = scalar_lea.hbm %s0, %s149
          %s152 = sshll.u32 %s142, 4
          %s153 = int_to_ptr.vmem [resolvable:$true] %s152
          %155 = dma.hbm_to_vmem [thread:$0]  %s150, 128, %s153, %s139
        $region20: #{tpu_custom_call.1} parent=15 // pred_fallthru
          _
        // Predicated region
        $region21: #{tpu_custom_call.1} parent=15 // pred_check
          %p156 = pneg %p84
        $region22: #{tpu_custom_call.1} parent=15 // pred_check_branch
          %158 = sbr.rel (%p156) target = $region24
        $region23: #{tpu_custom_call.1} parent=15 // pred_region
          %s159 = sand.u32 %s74, 1
          %s160 = scalar_lea.sflag [#allocation5], %s159
          %s161 = sand.u32 %s74, 1
          %s162 = smul.addr %s161, 8
          %s163 = scalar_lea.vmem [#allocation4], %s162
          %s164 = sadd.s32 %s21, %s22
          %p165 = scmp.lt.s32.totalorder %s164, 0
          %s166 = scalar_select %p165, %s164, 0
          %s168 = ssub.s32 128, 128
          %169 = vsyncadd %s160, %s168
          %s170 = smul.addr %s166, 128
          %s171 = scalar_lea.hbm %s1, %s170
          %s173 = sshll.u32 %s163, 4
          %s174 = int_to_ptr.vmem [resolvable:$true] %s173
          %176 = dma.hbm_to_vmem [thread:$0]  %s171, 128, %s174, %s160
        $region24: #{tpu_custom_call.1} parent=15 // pred_fallthru
          _
      $region16: #{tpu_custom_call.1} parent=5 // pred_fallthru
        _
      %p177 = scmp.le.s32.totalorder 1, %s14
      %p178 = scmp.lt.s32.totalorder %s14, 3
      %p179 = pnand %p177, %p178
      %p180 = pneg %p179
      // Predicated region
      $region25: #{tpu_custom_call.1} parent=5 // pred_check
        _
      $region26: #{tpu_custom_call.1} parent=5 // pred_check_branch
        %182 = sbr.rel (%p179) target = $region28
      $region27: #{tpu_custom_call.1} parent=5 // pred_region
        %s183 = ssub.s32 %s14, 1
        %s184 = sand.u32 %s45, 1
        %s185 = scalar_lea.sflag [#allocation3], %s184
        %s186 = sand.u32 %s45, 1
        %s187 = smul.addr %s186, 8
        %s188 = scalar_lea.vmem [#allocation2], %s187
        // Predicated region
        $region29: #{tpu_custom_call.1} parent=27 // pred_check
          %p189 = pneg %p58
        $region30: #{tpu_custom_call.1} parent=27 // pred_check_branch
          %191 = sbr.rel (%p189) target = $region32
        $region31: #{tpu_custom_call.1} parent=27 // pred_region
          %192 = dma.done %s185, 128
        $region32: #{tpu_custom_call.1} parent=27 // pred_fallthru
          _
        %s193 = sand.u32 %s77, 1
        %s194 = scalar_lea.sflag [#allocation5], %s193
        %s195 = sand.u32 %s77, 1
        %s196 = smul.addr %s195, 8
        %s197 = scalar_lea.vmem [#allocation4], %s196
        // Predicated region
        $region33: #{tpu_custom_call.1} parent=27 // pred_check
          %p198 = pneg %p90
        $region34: #{tpu_custom_call.1} parent=27 // pred_check_branch
          %200 = sbr.rel (%p198) target = $region36
        $region35: #{tpu_custom_call.1} parent=27 // pred_region
          %201 = dma.done %s194, 128
        $region36: #{tpu_custom_call.1} parent=27 // pred_fallthru
          _
        %s202 = sand.u32 %s45, 1
        %s203 = scalar_lea.sflag [#allocation3], %s202
        %s204 = sand.u32 %s45, 1
        %s205 = smul.addr %s204, 8
        %s206 = scalar_lea.vmem [#allocation2], %s205
        %p207 = pneg %p58
        %p208 = pneg %p55
        %s209 = sand.u32 %s77, 1
        %s210 = scalar_lea.sflag [#allocation5], %s209
        %s211 = sand.u32 %s77, 1
        %s212 = smul.addr %s211, 8
        %s213 = scalar_lea.vmem [#allocation4], %s212
        %p214 = pneg %p90
        %p215 = pneg %p87
        %p216 = pneg %p116
        %p217 = pneg %p113
        %p218 = scmp.lt.s32.totalorder %s23, 1
        %s219 = scalar_select %p218, %s23, 1
        %s220 = smul.addr %s219, 4
        %s221 = scalar_lea.vmem %s2, %s220
        %s222 = sadd.s32 %s23, %s24
        %p223 = scmp.lt.s32.totalorder %s222, 0
        %s224 = scalar_select %p223, %s222, 0
        %s225 = sadd.s32 %s23, %s24
        %p226 = scmp.lt.s32.totalorder %s225, 0
        %s227 = scalar_select %p226, %s225, 0
        %p228 = scmp.lt.s32.totalorder %s23, 1
        %s229 = scalar_select %p228, %s23, 1
        %s230 = smul.addr %s229, 4
        %s231 = scalar_lea.vmem %s2, %s230
        %p232 = scmp.eq.s32.totalorder %s24, 0
        // Predicated region
        $region37: #{tpu_custom_call.1} parent=27 // pred_check
          %p233 = pneg %p232
        $region38: #{tpu_custom_call.1} parent=27 // pred_check_branch
          %235 = sbr.rel (%p233) target = $region40
        $region39: #{tpu_custom_call.1} parent=27 // pred_region
          %236 = vst [vmem:[%s231] sm:$0x7] 0.0
        $region40: #{tpu_custom_call.1} parent=27 // pred_fallthru
          _
        %s237 = sadd.s32 %s23, %s24
        %s238 = smul.u32 %s237, 1024
        %v239 = vlaneseq
        %v240 = vshrl.u32 %v239, 7
        %v241 = vlaneseq
        %v242 = vand.u32 %v241, 127
        %v243 = vmul.u32 %v240, 128
        %v244 = vstv %s238
        %v245 = vadd.s32 %v244, %v243
        %v246 = vadd.s32 %v245, %v242
        %vm247 = vcmp.lt.s32.totalorder %v246, 512
        %v248 = vld [vmem:[%s188] sm:$0xff]
        %v249 = vxor.u32 %v248, 2147483648
        %v250 = vmul.f32 %v249, 1.442695
        %v251 = vpow.pop %v250
        %v252 = vadd.f32 %v251, 1.0
        %v253 = vrcp.pop %v252
        %v254 = vmul.f32 1.0, %v253
        %v255 = vsel %vm247, %v254, 0.0
        %v256 = vld [vmem:[%s197] sm:$0xff]
        %v257 = vsel %vm247, %v256, 0.0
        %v258 = vmul.f32 %v255, %v257
        %v259 = vrot.slane %v258, 4
        %v260 = vadd.f32 %v258, %v259
        %v261 = vrot.slane %v260, 2
        %v262 = vadd.f32 %v260, %v261
        %v263 = vrot.slane %v262, 1
        %v264 = vadd.f32 %v262, %v263
        %v265 = vrot.slane %v255, 4
        %v266 = vadd.f32 %v255, %v265
        %v267 = vrot.slane %v266, 2
        %v268 = vadd.f32 %v266, %v267
        %v269 = vrot.slane %v268, 1
        %v270 = vadd.f32 %v268, %v269
        %v271 = vrot.slane %v257, 4
        %v272 = vadd.f32 %v257, %v271
        %v273 = vrot.slane %v272, 2
        %v274 = vadd.f32 %v272, %v273
        %v275 = vrot.slane %v274, 1
        %v276 = vadd.f32 %v274, %v275
        %v277 = vld [vmem:[%s231] sm:$0x7]
        %vm278 = vcmask 1040384
        %v279 = vsel %vm278, %v264, %v270
        %vm280 = vcmask 1041408
        %v281 = vsel %vm280, %v279, %v276
        %v282 = vadd.f32 %v277, %v281
        %283 = vst [vmem:[%s231] sm:$0x7] %v282
        %p284 = scmp.lt.s32.totalorder %s23, 1
        %s285 = scalar_select %p284, %s23, 1
        %s286 = smul.addr %s285, 4
        %s287 = scalar_lea.vmem %s2, %s286
        // Predicated region
        $region41: #{tpu_custom_call.1} parent=27 // pred_check
          %p288 = pneg %p113
        $region42: #{tpu_custom_call.1} parent=27 // pred_check_branch
          %290 = sbr.rel (%p288) target = $region44
        $region43: #{tpu_custom_call.1} parent=27 // pred_region
          _
        $region44: #{tpu_custom_call.1} parent=27 // pred_fallthru
          _
      $region28: #{tpu_custom_call.1} parent=5 // pred_fallthru
        _
      %p291 = scmp.le.s32.totalorder 2, %s14
      // Predicated region
      $region45: #{tpu_custom_call.1} parent=5 // pred_check
        %p292 = pneg %p291
      $region46: #{tpu_custom_call.1} parent=5 // pred_check_branch
        %294 = sbr.rel (%p292) target = $region48
      $region47: #{tpu_custom_call.1} parent=5 // pred_region
        %s295 = ssub.s32 %s14, 2
        // Predicated region
        $region49: #{tpu_custom_call.1} parent=47 // pred_check
          %p296 = pneg %p119
        $region50: #{tpu_custom_call.1} parent=47 // pred_check_branch
          %298 = sbr.rel (%p296) target = $region52
        $region51: #{tpu_custom_call.1} parent=47 // pred_region
          %p299 = scmp.lt.s32.totalorder %s25, 1
          %s300 = scalar_select %p299, %s25, 1
          %s301 = smul.addr %s300, 4
          %s302 = scalar_lea.vmem %s2, %s301
        $region52: #{tpu_custom_call.1} parent=47 // pred_fallthru
          _
      $region48: #{tpu_custom_call.1} parent=5 // pred_fallthru
        _
    $region6: #{tpu_custom_call.1} parent=1 // loop_footer
      %s18 = sadd.s32 1, %s14
    $region7: #{tpu_custom_call.1} parent=1 // loop_footer_branch
      %13 = sbr.rel target = $region3
    $region8: #{tpu_custom_call.1} parent=1 // loop_exit
      _
    %303 = vsyncpa [#allocation3], 1
    %s304 = scalar_lea.sflag [#allocation3], 1
    %305 = vsyncpa %s304, 1
    %306 = vsyncpa [#allocation5], 1
    %s307 = scalar_lea.sflag [#allocation5], 1
    %308 = vsyncpa %s307, 1

</llo_original>
